<compile_context>
chip_gen: v7x
topology: tpu7x:2x2x1
jax: 0.10.0
libtpu: 0.0.40
codegen_flags: <defaults>
</compile_context>

<pallas_src>
import functools

import jax
import jax.numpy as jnp
import numpy as np
from jax import lax
from jax.experimental import pallas as pl
from jax.experimental.pallas import tpu as pltpu


def linear_interp_matrix(in_len: int, out_len: int) -> np.ndarray:
    """Matrix M [in_len, out_len] s.t. y @ M == F.interpolate(y, out_len,
    mode='linear', align_corners=False) along the last axis."""
    j = np.arange(out_len)
    src = (j + 0.5) * (in_len / out_len) - 0.5
    src = np.maximum(src, 0.0)                       # PyTorch clamps to >= 0
    x0 = np.minimum(np.floor(src).astype(np.int64), in_len - 1)
    x1 = np.minimum(x0 + 1, in_len - 1)
    lam = src - x0
    M = np.zeros((in_len, out_len), dtype=np.float32)
    M[x0, j] += (1.0 - lam)
    M[x1, j] += lam
    return M


def _head_kernel(x_ref, w_ref, b_ref, o_ref):
    # x_ref: [d_model, TN]       lane-dense column block of transposed activations
    # w_ref: [patch_len, d_model] fused  M^T @ W  (resident across the grid)
    # b_ref: [patch_len, 1]       fused  (bias @ M)^T, f32
    # o_ref: [patch_len, TN]
    y = jnp.dot(w_ref[...], x_ref[...], preferred_element_type=jnp.float32)
    o_ref[...] = (y + b_ref[...]).astype(o_ref.dtype)   # f32 epilogue (v5e-safe)


# Double-buffered in+out block budget and scoped-VMEM limit.  20 MiB of blocks
# + tiny resident weights stays <= ~half of v7x's 64 MiB physical VMEM, raises
# v5e's 16 MiB scoped default, and is large enough to sit at ~85%+ of the HBM
# roofline on v6e (per the measured tile-size curve).
_VMEM_BLOCK_BUDGET = 20 * 1024 * 1024
_VMEM_LIMIT_BYTES = 28 * 1024 * 1024
_LANE = 128
_MIN_GRID_STEPS = 4


def _round_up(a: int, b: int) -> int:
    return -(-a // b) * b


@functools.partial(jax.jit, static_argnames=("patch_len",))
def decoder_predict_head(x, weight, bias, patch_len: int):
    """
    x:      [bs, nvars, d_model, num_patch]   float32 or bfloat16
    weight: [target_patch_len, d_model]       (nn.Linear weight)
    bias:   [target_patch_len]
    returns [bs, num_patch * patch_len, nvars]  (dtype of x)
    """
    bs, nvars, d_model, num_patch = x.shape
    tgt = weight.shape[0]
    bv = bs * nvars
    total_cols = bv * num_patch
    out_dtype = x.dtype

    # --- fold Linear + interpolation into one weight / bias (exact algebra) ---
    m = jnp.asarray(linear_interp_matrix(tgt, patch_len))                 # [tgt, p]
    hi = lax.Precision.HIGHEST
    wft = jnp.dot(m.T, weight.astype(jnp.float32), precision=hi)          # [p, d_model]
    bf = jnp.dot(bias.astype(jnp.float32), m, precision=hi)               # [p]
    wft = wft.astype(x.dtype)                       # bf16 x -> bf16 MXU operands
    bf = bf.reshape(patch_len, 1).astype(jnp.float32)

    # --- one wrapper-side transpose to a lane-dense [d_model, bv*num_patch] view.
    # Costs one extra HBM round trip of the input (done by XLA), but turns every
    # kernel step into a single unmasked, full-lane matmul + store.
    xt = jnp.transpose(x.reshape(bv, d_model, num_patch),
                       (1, 0, 2)).reshape(d_model, total_cols)

    # --- column tile under a PADDED-VMEM budget -------------------------------
    in_isz = jnp.dtype(x.dtype).itemsize
    out_isz = jnp.dtype(out_dtype).itemsize
    sub_in = 8 * (4 // in_isz)                       # sublane pad: 8 (f32) / 16 (bf16)
    sub_out = 8 * (4 // out_isz)
    # bytes per column of (input block + output block), x2 for double buffering
    col_bytes = 2 * (_round_up(d_model, sub_in) * in_isz
                     + _round_up(patch_len, sub_out) * out_isz)

    if total_cols <= _LANE:
        tn = total_cols                              # tiny problem: one full block
    else:
        cap = max(_LANE, (_VMEM_BLOCK_BUDGET // col_bytes) // _LANE * _LANE)
        # aim for >= _MIN_GRID_STEPS parallel steps (v7x: 2 TCs x double buffer)
        want = _round_up(pl.cdiv(total_cols, _MIN_GRID_STEPS), _LANE)
        tn = min(cap, want, _round_up(total_cols, _LANE))
        if tn >= 2 * _LANE:
            tn = (tn // (2 * _LANE)) * (2 * _LANE)   # 256-lane multiples (v6e/v7x MXU)
    grid = (pl.cdiv(total_cols, tn),)                # masked partial tail if needed

    y = pl.pallas_call(
        _head_kernel,
        out_shape=jax.ShapeDtypeStruct((patch_len, total_cols), out_dtype),
        grid_spec=pltpu.PrefetchScalarGridSpec(
            num_scalar_prefetch=0,
            grid=grid,
            in_specs=[
                pl.BlockSpec((d_model, tn), lambda i: (0, i)),
                pl.BlockSpec((patch_len, d_model), lambda i: (0, 0)),
                pl.BlockSpec((patch_len, 1), lambda i: (0, 0)),
            ],
            out_specs=pl.BlockSpec((patch_len, tn), lambda i: (0, i)),
        ),
        compiler_params=pltpu.CompilerParams(
            dimension_semantics=("parallel",),
            vmem_limit_bytes=_VMEM_LIMIT_BYTES),
    )(xt, wft, bf)

    # glue (XLA): y[p, (b*V+v)*N + n] -> out[b, n*P + p, v].  Kept outside the
    # kernel on purpose: an nvars(~4)-wide lane dim inside the out_spec would
    # reintroduce masked stores.
    out = y.reshape(patch_len, bs, nvars, num_patch)
    out = jnp.transpose(out, (1, 3, 0, 2)).reshape(bs, num_patch * patch_len, nvars)
    return out


def _reference(x, weight, bias, patch_len):
    """Pure-JAX reference matching the PyTorch forward."""
    bs, nvars, d_model, num_patch = x.shape
    tgt = weight.shape[0]
    y = jnp.transpose(x, (0, 1, 3, 2)).astype(jnp.float32)       # [bs,nvars,np,d]
    y = jnp.einsum("bvnd,td->bvnt", y, weight.astype(jnp.float32),
                   precision=lax.Precision.HIGHEST) + bias       # linear + bias
    m = jnp.asarray(linear_interp_matrix(tgt, patch_len))
    z = jnp.einsum("bvnt,tp->bvnp", y, m,
                   precision=lax.Precision.HIGHEST)              # F.interpolate
    z = jnp.transpose(z, (0, 2, 3, 1))                           # [bs,np,p,nvars]
    return z.reshape(bs, num_patch * patch_len, nvars)


if __name__ == "__main__":
    # small, module-consistent shapes
    bs, nvars, d_model, num_patch = 2, 4, 32, 8
    target_patch_len = 16
    patch_len = 24   # runtime-requested patch length (interpolation target)

    key = jax.random.PRNGKey(0)
    kx, kw, kb = jax.random.split(key, 3)
    x = jax.random.normal(kx, (bs, nvars, d_model, num_patch), dtype=jnp.float32)
    weight = jax.random.normal(kw, (target_patch_len, d_model), dtype=jnp.float32) * 0.05
    bias = jax.random.normal(kb, (target_patch_len,), dtype=jnp.float32) * 0.05

    ref = _reference(x, weight, bias, patch_len)

    # f32 path (single full block)
    out = decoder_predict_head(x, weight, bias, patch_len)
    out = jax.block_until_ready(out)
    assert out.shape == (bs, num_patch * patch_len, nvars), out.shape
    err = float(jnp.max(jnp.abs(out.astype(jnp.float32) - ref)))
    assert err < 1e-3, f"f32 max abs err {err}"

    # bf16 activation path (halves HBM read traffic); f32 accumulation/epilogue.
    out_bf16 = decoder_predict_head(x.astype(jnp.bfloat16), weight, bias, patch_len)
    out_bf16 = jax.block_until_ready(out_bf16)
    err_bf = float(jnp.max(jnp.abs(out_bf16.astype(jnp.float32) - ref)))
    assert err_bf < 5e-2, f"bf16 max abs err {err_bf}"

    # non-divisible (masked tail block) path: total columns = 4*5*8 = 160 -> tn=128,
    # grid=(2,) with a 32-column masked tail.
    bs2, nvars2 = 4, 5
    kx2 = jax.random.split(key, 4)[3]
    x2 = jax.random.normal(kx2, (bs2, nvars2, d_model, num_patch), dtype=jnp.float32)
    ref2 = _reference(x2, weight, bias, patch_len)
    out2 = decoder_predict_head(x2, weight, bias, patch_len)
    out2 = jax.block_until_ready(out2)
    assert out2.shape == (bs2, num_patch * patch_len, nvars2), out2.shape
    err2 = float(jnp.max(jnp.abs(out2.astype(jnp.float32) - ref2)))
    assert err2 < 1e-3, f"tail-block max abs err {err2}"

    print("KERNEL_OK")
</pallas_src>

<mosaic_0001>
module attributes {stable_mosaic.version = 11 : i64} {
  func.func @_head_kernel(%arg0: i32, %arg1: memref<32x64xf32, #tpu.memory_space<vmem>>, %arg2: memref<24x32xf32, #tpu.memory_space<vmem>>, %arg3: memref<24x1xf32, #tpu.memory_space<vmem>>, %arg4: memref<24x64xf32, #tpu.memory_space<vmem>>) attributes {dimension_semantics = [#tpu.dimension_semantics<parallel>], iteration_bounds = array<i64: 1>, scalar_prefetch = 0 : i64, scratch_operands = 0 : i64, tpu.core_type = #tpu.core_type<tc>, window_params = [{transform_indices = @transform_0, window_bounds = array<i64: 32, 64>}, {pipeline_mode = #tpu.pipeline_mode<synchronous>, transform_indices = @transform_1, window_bounds = array<i64: 24, 32>}, {pipeline_mode = #tpu.pipeline_mode<synchronous>, transform_indices = @transform_2, window_bounds = array<i64: 24, 1>}, {transform_indices = @transform_3, window_bounds = array<i64: 24, 64>}]} {
    %c0 = arith.constant 0 : index
    %c0_0 = arith.constant 0 : index
    %0 = vector.load %arg2[%c0, %c0_0] : memref<24x32xf32, #tpu.memory_space<vmem>>, vector<24x32xf32>
    %c0_1 = arith.constant 0 : index
    %c0_2 = arith.constant 0 : index
    %1 = vector.load %arg1[%c0_1, %c0_2] : memref<32x64xf32, #tpu.memory_space<vmem>>, vector<32x64xf32>
    %cst = arith.constant dense<0.000000e+00> : vector<24x64xf32>
    %2 = tpu.matmul %0, %1, %cst {dimension_numbers = #tpu.dot_dimension_numbers<[1], [0], [0], [1], [0, 0, 1, 1], [], []>} : vector<24x32xf32>, vector<32x64xf32>, vector<24x64xf32> -> vector<24x64xf32>
    %c0_3 = arith.constant 0 : index
    %c0_4 = arith.constant 0 : index
    %3 = vector.load %arg3[%c0_3, %c0_4] : memref<24x1xf32, #tpu.memory_space<vmem>>, vector<24x1xf32>
    %4 = vector.broadcast %3 : vector<24x1xf32> to vector<24x64xf32>
    %5 = arith.addf %2, %4 : vector<24x64xf32>
    %c0_5 = arith.constant 0 : index
    %c0_6 = arith.constant 0 : index
    %6 = vector.load %arg4[%c0_5, %c0_6] : memref<24x64xf32, #tpu.memory_space<vmem>>, vector<24x64xf32>
    tpu.vector_store %arg4[%c0_5, %c0_6], %5 {strides = array<i32>} : memref<24x64xf32, #tpu.memory_space<vmem>>, vector<24x64xf32>,
    return
  }
  func.func @transform_0(%arg0: i32) -> (i32, i32) {
    %c0_i32 = arith.constant 0 : i32
    %c0_i32_0 = arith.constant 0 : i32
    return %c0_i32, %arg0 : i32, i32
  }
  func.func @transform_1(%arg0: i32) -> (i32, i32) {
    %c0_i32 = arith.constant 0 : i32
    %c0_i32_0 = arith.constant 0 : i32
    %c0_i32_1 = arith.constant 0 : i32
    return %c0_i32, %c0_i32_0 : i32, i32
  }
  func.func @transform_2(%arg0: i32) -> (i32, i32) {
    %c0_i32 = arith.constant 0 : i32
    %c0_i32_0 = arith.constant 0 : i32
    %c0_i32_1 = arith.constant 0 : i32
    return %c0_i32, %c0_i32_0 : i32, i32
  }
  func.func @transform_3(%arg0: i32) -> (i32, i32) {
    %c0_i32 = arith.constant 0 : i32
    %c0_i32_0 = arith.constant 0 : i32
    return %c0_i32, %arg0 : i32, i32
  }
}

</mosaic_0001>

<llo_original>
// kernel: decoder_predict_head.1
$region0: #{decoder_predict_head.1}
  #allocation0 [shape = 'u32[]', space=smem, size = 0x4, offset = 0x4, fixed_abs, tag = 'smem constant byte address 0x4 - core index']
  #allocation1 [shape = 'u32[144,128]{1,0:T(1,128)}', space=vmem, size = 0x12000, scoped, tag = 'internal scratch']
  %s0 = inlined_call_operand.vmem [shape: f32[32,64], index: 0, kind: input, shape index: {}]
  %s1 = inlined_call_operand.vmem [shape: f32[24,32], index: 1, kind: input, shape index: {}]
  %s2 = inlined_call_operand.vmem [shape: f32[24,1], index: 2, kind: input, shape index: {}]
  %s3 = inlined_call_operand.vmem [shape: f32[24,64], index: 3, kind: output, shape index: {}]
  %s4 = sld [smem:[#allocation0]]
  $region22: #{decoder_predict_head.1} parent=0
    _
  %s6 = ssub.s32 1, %s4
  %s7 = scalar_select 0, %s6, %s4
  // Predicated region
  $region2: #{decoder_predict_head.1} parent=0 // pred_check
    _
  $region3: #{decoder_predict_head.1} parent=0 // pred_check_branch
    %9 = sbr.rel (0) target = $region5
  $region4: #{decoder_predict_head.1} parent=0 // pred_region
    _
  $region5: #{decoder_predict_head.1} parent=0 // pred_fallthru
    _
  // Predicated region
  $region6: #{decoder_predict_head.1} parent=0 // pred_check
    _
  $region7: #{decoder_predict_head.1} parent=0 // pred_check_branch
    %11 = sbr.rel (0) target = $region9
  $region8: #{decoder_predict_head.1} parent=0 // pred_region
    _
  $region9: #{decoder_predict_head.1} parent=0 // pred_fallthru
    _
  // Predicated region
  $region10: #{decoder_predict_head.1} parent=0 // pred_check
    _
  $region11: #{decoder_predict_head.1} parent=0 // pred_check_branch
    %13 = sbr.rel (0) target = $region13
  $region12: #{decoder_predict_head.1} parent=0 // pred_region
    _
  $region13: #{decoder_predict_head.1} parent=0 // pred_fallthru
    _
  %v14 = vld [vmem:[%s1] sm:$0xff]
  %v15 = vld [vmem:[%s1 + $0x8] sm:$0xff]
  %v16 = vld [vmem:[%s1 + $0x10] sm:$0xff]
  %v17 = vld [vmem:[%s0] sm:$0xff]
  %v18 = vld [vmem:[%s0 + $0x8] sm:$0xff]
  %v19 = vld [vmem:[%s0 + $0x10] sm:$0xff]
  %v20 = vld [vmem:[%s0 + $0x18] sm:$0xff]
  %v21 = vld [vmem:[%s2] sm:$0xff]
  %v22 = vld [vmem:[%s2 + $0x8] sm:$0xff]
  %v23 = vld [vmem:[%s2 + $0x10] sm:$0xff]
  %25 = vset.pattern.permute.xlu0 0
  %26 = vperm.xlu0 %25, %v21
  %v27 = vpop.permute.xlu0 %26
  %30 = vset.pattern.permute.xlu0 0
  %31 = vperm.xlu0 %30, %v22
  %v32 = vpop.permute.xlu0 %31
  %35 = vset.pattern.permute.xlu0 0
  %36 = vperm.xlu0 %35, %v23
  %v37 = vpop.permute.xlu0 %36
  %vm39 = vcmask 261120
  %v41 = vsel %vm39, %v14, 0
  %v44 = vsel %vm39, %v15, 0
  %v47 = vsel %vm39, %v16, 0
  %49 = vmatprep.subr.mxu0 0.0
  %50 = vmatpush1.msra.mxu0 %v17
  %51 = vmatprep.subr.mxu0 0.0
  %52 = vmatpush1.msra.mxu0 %v18
  %53 = vmatprep.subr.mxu0 0.0
  %54 = vmatpush1.msra.mxu0 %v19
  %55 = vmatprep.subr.mxu0 0.0
  %56 = vmatpush1.msra.mxu0 %v20
  %57 = vmatprep.subr.mxu0 0.0
  %58 = vmatpush1.msra.mxu0 0.0
  %59 = vmatprep.subr.mxu0 0.0
  %60 = vmatpush1.msra.mxu0 0.0
  %61 = vmatprep.subr.mxu0 0.0
  %62 = vmatpush1.msra.mxu0 0.0
  %63 = vmatprep.subr.mxu0 0.0
  %64 = vmatpush1.msra.mxu0 0.0
  %65 = vmatprep.subr.mxu0 0.0
  %66 = vmatpush1.msra.mxu0 0.0
  %67 = vmatprep.subr.mxu0 0.0
  %68 = vmatpush1.msra.mxu0 0.0
  %69 = vmatprep.subr.mxu0 0.0
  %70 = vmatpush1.msra.mxu0 0.0
  %71 = vmatprep.subr.mxu0 0.0
  %72 = vmatpush1.msra.mxu0 0.0
  %73 = vmatprep.subr.mxu0 0.0
  %74 = vmatpush1.msra.mxu0 0.0
  %75 = vmatprep.subr.mxu0 0.0
  %76 = vmatpush1.msra.mxu0 0.0
  %77 = vmatprep.subr.mxu0 0.0
  %78 = vmatpush1.msra.mxu0 0.0
  %79 = vmatprep.subr.mxu0 0.0
  %80 = vmatpush1.msra.mxu0 0.0
  %81 = vmatprep.subr.mxu0 0.0
  %82 = vmatpush1.msra.mxu0 0.0
  %83 = vmatprep.subr.mxu0 0.0
  %84 = vmatpush1.msra.mxu0 0.0
  %85 = vmatprep.subr.mxu0 0.0
  %86 = vmatpush1.msra.mxu0 0.0
  %87 = vmatprep.subr.mxu0 0.0
  %88 = vmatpush1.msra.mxu0 0.0
  %89 = vmatprep.subr.mxu0 0.0
  %90 = vmatpush1.msra.mxu0 0.0
  %91 = vmatprep.subr.mxu0 0.0
  %92 = vmatpush1.msra.mxu0 0.0
  %93 = vmatprep.subr.mxu0 0.0
  %94 = vmatpush1.msra.mxu0 0.0
  %95 = vmatprep.subr.mxu0 0.0
  %96 = vmatpush1.msra.mxu0 0.0
  %97 = vmatprep.subr.mxu0 0.0
  %98 = vmatpush1.msra.mxu0 0.0
  %99 = vmatprep.subr.mxu0 0.0
  %100 = vmatpush1.msra.mxu0 0.0
  %101 = vmatprep.subr.mxu0 0.0
  %102 = vmatpush1.msra.mxu0 0.0
  %103 = vmatprep.subr.mxu0 0.0
  %104 = vmatpush1.msra.mxu0 0.0
  %105 = vmatprep.subr.mxu0 0.0
  %106 = vmatpush1.msra.mxu0 0.0
  %107 = vmatprep.subr.mxu0 0.0
  %108 = vmatpush1.msra.mxu0 0.0
  %109 = vmatprep.subr.mxu0 0.0
  %110 = vmatpush1.msra.mxu0 0.0
  %111 = vmatprep.subr.mxu0 0.0
  %112 = vmatpush1.msra.mxu0 0.0
  %113 = vmatprep.mubr.f32.mxu0 0.0
  %114 = vmatmul.mubr.f32.gmra.mrb[0].mxu0 %v41
  %v115 = vpop.f32.mrb[0].mxu0
  %v116 = vadd.f32 %v27, %v115
  %v117 = vpop.f32.mrb[0].mxu0
  %118 = vmatprep.mubr.f32.mxu0 0.0
  %119 = vmatmul.mubr.f32.gmra.mrb[0].mxu0 %v44
  %v120 = vpop.f32.mrb[0].mxu0
  %v121 = vadd.f32 %v32, %v120
  %v122 = vpop.f32.mrb[0].mxu0
  %123 = vmatprep.mubr.f32.mxu0 0.0
  %124 = vmatmul.mubr.f32.gmra.mrb[0].mxu0 %v47
  %v125 = vpop.f32.mrb[0].mxu0
  %v126 = vadd.f32 %v37, %v125
  %v127 = vpop.f32.mrb[0].mxu0
  %128 = vdwg.mxu0
  %vm129 = vcmask 523264
  %130 = vst.msk [vmem:[%s3] sm:$0xff] %vm129, %v116
  %131 = vst.msk [vmem:[%s3 + $0x8] sm:$0xff] %vm129, %v121
  %132 = vst.msk [vmem:[%s3 + $0x10] sm:$0xff] %vm129, %v126
  // Predicated region
  $region14: #{decoder_predict_head.1} parent=0 // pred_check
    _
  $region15: #{decoder_predict_head.1} parent=0 // pred_check_branch
    %134 = sbr.rel (0) target = $region17
  $region16: #{decoder_predict_head.1} parent=0 // pred_region
    _
  $region17: #{decoder_predict_head.1} parent=0 // pred_fallthru
    _
  // Predicated region
  $region18: #{decoder_predict_head.1} parent=0 // pred_check
    _
  $region19: #{decoder_predict_head.1} parent=0 // pred_check_branch
    %136 = sbr.rel (0) target = $region21
  $region20: #{decoder_predict_head.1} parent=0 // pred_region
    _
  $region21: #{decoder_predict_head.1} parent=0 // pred_fallthru
    _

</llo_original>
